<compile_context>
chip_gen: v6e
topology: v6e:2x2x1
jax: 0.10.0
libtpu: 0.0.40
codegen_flags: <defaults>
</compile_context>

<pallas_src>
import functools

import jax
import jax.numpy as jnp
from jax import lax
from jax.experimental import pallas as pl
from jax.experimental.pallas import tpu as pltpu


def _group_norm_kernel(x_ref, w_ref, b_ref, o_ref, *, eps, inv_n):
    # x_ref: (1, T, 1, R, L) -- one (batch, group) slab, lane-dense in L.
    # w_ref / b_ref: (1, 1, 1, R, 1) -- per-row (channel-repeated) affine params.
    xf = x_ref[...].astype(jnp.float32)

    # One-pass statistics: biased variance = E[x^2] - mean^2 (matches PyTorch).
    s = jnp.sum(xf)
    s2 = jnp.sum(xf * xf)
    mean = s * inv_n
    var = jnp.maximum(s2 * inv_n - mean * mean, 0.0)
    inv = lax.rsqrt(var + eps)

    scale = w_ref[...].astype(jnp.float32) * inv              # (1, 1, 1, R, 1)
    shift = b_ref[...].astype(jnp.float32) - mean * scale     # (1, 1, 1, R, 1)

    # Re-read the VMEM tile for the normalize sweep (vld is cheap: 3/cycle)
    # instead of keeping the whole tile live across stats -> normalize.
    o_ref[...] = (x_ref[...].astype(jnp.float32) * scale + shift).astype(o_ref.dtype)


def _phys_vmem_bytes():
    try:
        return int(pltpu.get_tpu_info().vmem_capacity_bytes)
    except Exception:
        return 64 << 20  # conservative default (v7x per-core VMEM)


def _pick_fold(cg, s):
    """Pick f | s so the (cg*f, s//f) tile wastes the fewest padded vregs.

    Ties are broken toward the widest lane dim (denser, unmasked stores).
    """
    best_f, best_key = 1, None
    limit = min(int(s), 1024)
    for f in range(1, limit + 1):
        if s % f:
            continue
        rows, lanes = cg * f, s // f
        vregs = (-(-rows // 8)) * (-(-lanes // 128))
        key = (vregs, -lanes)
        if best_key is None or key < best_key:
            best_f, best_key = f, key
    return best_f


def _group_norm_lane_dense(xc, w5, b5, eps):
    """GroupNorm on the canonical lane-dense view xc: (B, T, G, R, L)."""
    B, T, G, R, L = xc.shape

    itemsize = jnp.dtype(xc.dtype).itemsize
    block_bytes = T * R * L * itemsize
    # Double-buffered input + output blocks (+ headroom for w/b & scratch).
    needed = 4 * block_bytes + (2 << 20)
    cap = min(96 << 20, (_phys_vmem_bytes() * 3) // 4)
    vmem_limit = int(min(max(needed, 32 << 20), cap))
    # TODO(synk): if a single (batch, group) slab exceeds the VMEM cap (huge
    # video/diffusion shapes on v7x's 64 MiB VMEM), split L into chunks with a
    # stats-accumulate + normalize two-phase grid instead of one whole-group block.

    numel = B * T * G * R * L
    cost = pl.CostEstimate(
        flops=7 * numel,
        transcendentals=B * G,
        bytes_accessed=2 * numel * itemsize + 2 * G * R * 4,
    )

    kernel = functools.partial(
        _group_norm_kernel, eps=float(eps), inv_n=1.0 / float(T * R * L))

    return pl.pallas_call(
        kernel,
        out_shape=jax.ShapeDtypeStruct(xc.shape, xc.dtype),
        grid_spec=pltpu.PrefetchScalarGridSpec(
            num_scalar_prefetch=0,
            grid=(G, B),  # B innermost -> w/b block index constant -> resident.
            in_specs=[
                pl.BlockSpec((1, T, 1, R, L), lambda g, b: (b, 0, g, 0, 0)),
                pl.BlockSpec((1, 1, 1, R, 1), lambda g, b: (g, 0, 0, 0, 0)),
                pl.BlockSpec((1, 1, 1, R, 1), lambda g, b: (g, 0, 0, 0, 0)),
            ],
            out_specs=pl.BlockSpec((1, T, 1, R, L), lambda g, b: (b, 0, g, 0, 0)),
        ),
        compiler_params=pltpu.CompilerParams(
            dimension_semantics=("parallel", "parallel"),
            vmem_limit_bytes=vmem_limit,
        ),
        cost_estimate=cost,
    )(xc, w5, b5)


def group_norm_32(x, weight, bias, group, channel, eps=1e-5):
    """Forward pass of GroupNorm32 (handles (N,C,*) and both 5-D layouts)."""
    assert channel % group == 0
    cg = channel // group

    if x.ndim == 5 and x.shape[1] != channel:
        # Module would rearrange 'b t c h w -> b c t h w', GroupNorm, rearrange
        # back.  Both transposes are fused away: the (batch, group) slab spans
        # (T, C/G, H*W) and is gathered straight from the original layout by
        # the BlockSpec; the output lands back in the original layout.
        B, T, C = int(x.shape[0]), int(x.shape[1]), int(x.shape[2])
        assert C == channel
        S = int(x.shape[3]) * int(x.shape[4])
    else:
        # Channels at dim 1 (NCHW / (B,C,T,H,W) / any (N,C,*)): the group slab
        # is contiguous; flatten everything after the channel split.
        B, C = int(x.shape[0]), int(x.shape[1])
        assert C == channel
        T = 1
        S = 1
        for d in x.shape[2:]:
            S *= int(d)

    # Fold a factor f of S into the sublane axis so (rows, lanes) = (cg*f, S/f)
    # packs vregs densely even when C/G is narrow (< 8).
    f = _pick_fold(cg, S)
    R, L = cg * f, S // f

    xc = x.reshape(B, T, group, R, L)
    w5 = jnp.repeat(weight.astype(jnp.float32).reshape(group, cg), f, axis=1
                    ).reshape(group, 1, 1, R, 1)
    b5 = jnp.repeat(bias.astype(jnp.float32).reshape(group, cg), f, axis=1
                    ).reshape(group, 1, 1, R, 1)

    # TODO(synk): pack several (batch, group) slabs per grid step when T*R*L is
    # tiny to amortize the ~0.35 us per-grid-step overhead.
    y = _group_norm_lane_dense(xc, w5, b5, eps)
    return y.reshape(x.shape)


if __name__ == "__main__":
    key = jax.random.PRNGKey(0)
    kx, kw, kb, kx5, kx5b = jax.random.split(key, 5)

    group, channel = 2, 4
    B, H, W = 2, 16, 16
    T = 3

    x = jax.random.normal(kx, (B, channel, H, W), dtype=jnp.float32)
    # nn.GroupNorm defaults to weight=1, bias=0; use random values so the affine
    # path is actually exercised (deterministic from PRNGKey(0)).
    weight = jax.random.normal(kw, (channel,), dtype=jnp.float32)
    bias = jax.random.normal(kb, (channel,), dtype=jnp.float32)

    # ---- 4-D path ----
    y = group_norm_32(x, weight, bias, group, channel)
    jax.block_until_ready(y)

    def ref_gn_4d(xx):
        Bb, C, Hh, Ww = xx.shape
        xr = xx.reshape(Bb, group, -1)
        mean = xr.mean(-1, keepdims=True)
        var = ((xr - mean) ** 2).mean(-1, keepdims=True)
        xn = ((xr - mean) / jnp.sqrt(var + 1e-5)).reshape(Bb, C, Hh, Ww)
        return xn * weight[None, :, None, None] + bias[None, :, None, None]

    assert jnp.allclose(y, ref_gn_4d(x), atol=1e-4, rtol=1e-4), "4-D mismatch"

    # ---- 5-D path that triggers the (fused) rearrange (x.shape[1] != channel) ----
    x5 = jax.random.normal(kx5, (B, T, channel, H, W), dtype=jnp.float32)
    y5 = group_norm_32(x5, weight, bias, group, channel)
    jax.block_until_ready(y5)
    assert y5.shape == x5.shape

    def ref_gn_5d_rearranged(xx):
        xt = jnp.transpose(xx, (0, 2, 1, 3, 4))          # b c t h w
        Bb, C, Tt, Hh, Ww = xt.shape
        xr = xt.reshape(Bb, group, -1)
        mean = xr.mean(-1, keepdims=True)
        var = ((xr - mean) ** 2).mean(-1, keepdims=True)
        xn = ((xr - mean) / jnp.sqrt(var + 1e-5)).reshape(Bb, C, Tt, Hh, Ww)
        xn = (xn * weight[None, :, None, None, None]
              + bias[None, :, None, None, None])
        return jnp.transpose(xn, (0, 2, 1, 3, 4))        # back to b t c h w

    assert jnp.allclose(y5, ref_gn_5d_rearranged(x5), atol=1e-4, rtol=1e-4), \
        "5-D rearranged mismatch"

    # ---- 5-D path with channels already at dim 1 (no rearrange) ----
    x5b = jax.random.normal(kx5b, (B, channel, T, H, W), dtype=jnp.float32)
    y5b = group_norm_32(x5b, weight, bias, group, channel)
    jax.block_until_ready(y5b)

    def ref_gn_5d(xx):
        Bb, C = xx.shape[0], xx.shape[1]
        xr = xx.reshape(Bb, group, -1)
        mean = xr.mean(-1, keepdims=True)
        var = ((xr - mean) ** 2).mean(-1, keepdims=True)
        xn = ((xr - mean) / jnp.sqrt(var + 1e-5)).reshape(xx.shape)
        return (xn * weight[None, :, None, None, None]
                + bias[None, :, None, None, None])

    assert jnp.allclose(y5b, ref_gn_5d(x5b), atol=1e-4, rtol=1e-4), \
        "5-D (no rearrange) mismatch"

    print("KERNEL_OK")
</pallas_src>

<mosaic_0001>
module attributes {stable_mosaic.version = 11 : i64} {
  func.func @_group_norm_kernel(%arg0: i32, %arg1: i32, %arg2: memref<1x1x1x4x128xf32, #tpu.memory_space<vmem>>, %arg3: memref<1x1x1x4x1xf32, #tpu.memory_space<vmem>>, %arg4: memref<1x1x1x4x1xf32, #tpu.memory_space<vmem>>, %arg5: memref<1x1x1x4x128xf32, #tpu.memory_space<vmem>>) attributes {dimension_semantics = [#tpu.dimension_semantics<parallel>, #tpu.dimension_semantics<parallel>], iteration_bounds = array<i64: 2, 2>, scalar_prefetch = 0 : i64, scratch_operands = 0 : i64, tpu.core_type = #tpu.core_type<tc>, window_params = [{transform_indices = @transform_0, window_bounds = array<i64: 1, 1, 1, 4, 128>}, {transform_indices = @transform_1, window_bounds = array<i64: 1, 1, 1, 4, 1>}, {transform_indices = @transform_2, window_bounds = array<i64: 1, 1, 1, 4, 1>}, {transform_indices = @transform_3, window_bounds = array<i64: 1, 1, 1, 4, 128>}]} {
    %c0 = arith.constant 0 : index
    %c0_0 = arith.constant 0 : index
    %c0_1 = arith.constant 0 : index
    %c0_2 = arith.constant 0 : index
    %c0_3 = arith.constant 0 : index
    %0 = vector.load %arg2[%c0, %c0_0, %c0_1, %c0_2, %c0_3] : memref<1x1x1x4x128xf32, #tpu.memory_space<vmem>>, vector<1x1x1x4x128xf32>
    %1 = vector.shape_cast %0 : vector<1x1x1x4x128xf32> to vector<1x1x1x1x4x128xf32>
    %cst = arith.constant dense<0.000000e+00> : vector<1xf32>
    %2 = vector.multi_reduction <add>, %1, %cst [1, 2, 3, 4, 5] : vector<1x1x1x1x4x128xf32> to vector<1xf32>
    %3 = vector.shape_cast %2 : vector<1xf32> to vector<1x1x1x1x1x1xf32>
    %4 = vector.extract %3[0, 0, 0, 0, 0, 0] : f32 from vector<1x1x1x1x1x1xf32>
    %5 = arith.mulf %0, %0 : vector<1x1x1x4x128xf32>
    %6 = vector.shape_cast %5 : vector<1x1x1x4x128xf32> to vector<1x1x1x1x4x128xf32>
    %cst_4 = arith.constant dense<0.000000e+00> : vector<1xf32>
    %7 = vector.multi_reduction <add>, %6, %cst_4 [1, 2, 3, 4, 5] : vector<1x1x1x1x4x128xf32> to vector<1xf32>
    %8 = vector.shape_cast %7 : vector<1xf32> to vector<1x1x1x1x1x1xf32>
    %9 = vector.extract %8[0, 0, 0, 0, 0, 0] : f32 from vector<1x1x1x1x1x1xf32>
    %cst_5 = arith.constant 0.001953125 : f32
    %10 = arith.mulf %4, %cst_5 : f32
    %cst_6 = arith.constant 0.001953125 : f32
    %11 = arith.mulf %9, %cst_6 : f32
    %12 = arith.mulf %10, %10 : f32
    %13 = arith.subf %11, %12 : f32
    %cst_7 = arith.constant 0.000000e+00 : f32
    %14 = arith.maximumf %13, %cst_7 : f32
    %cst_8 = arith.constant 9.99999974E-6 : f32
    %15 = arith.addf %14, %cst_8 : f32
    %16 = math.rsqrt %15 : f32
    %c0_9 = arith.constant 0 : index
    %c0_10 = arith.constant 0 : index
    %c0_11 = arith.constant 0 : index
    %c0_12 = arith.constant 0 : index
    %c0_13 = arith.constant 0 : index
    %17 = vector.load %arg3[%c0_9, %c0_10, %c0_11, %c0_12, %c0_13] : memref<1x1x1x4x1xf32, #tpu.memory_space<vmem>>, vector<1x1x1x4x1xf32>
    %18 = vector.broadcast %16 : f32 to vector<1x1x1x4x1xf32>
    %19 = arith.mulf %17, %18 : vector<1x1x1x4x1xf32>
    %c0_14 = arith.constant 0 : index
    %c0_15 = arith.constant 0 : index
    %c0_16 = arith.constant 0 : index
    %c0_17 = arith.constant 0 : index
    %c0_18 = arith.constant 0 : index
    %20 = vector.load %arg4[%c0_14, %c0_15, %c0_16, %c0_17, %c0_18] : memref<1x1x1x4x1xf32, #tpu.memory_space<vmem>>, vector<1x1x1x4x1xf32>
    %21 = vector.broadcast %10 : f32 to vector<1x1x1x4x1xf32>
    %22 = arith.mulf %21, %19 : vector<1x1x1x4x1xf32>
    %23 = arith.subf %20, %22 : vector<1x1x1x4x1xf32>
    %c0_19 = arith.constant 0 : index
    %c0_20 = arith.constant 0 : index
    %c0_21 = arith.constant 0 : index
    %c0_22 = arith.constant 0 : index
    %c0_23 = arith.constant 0 : index
    %24 = vector.load %arg2[%c0_19, %c0_20, %c0_21, %c0_22, %c0_23] : memref<1x1x1x4x128xf32, #tpu.memory_space<vmem>>, vector<1x1x1x4x128xf32>
    %25 = vector.broadcast %19 : vector<1x1x1x4x1xf32> to vector<1x1x1x4x128xf32>
    %26 = arith.mulf %24, %25 : vector<1x1x1x4x128xf32>
    %27 = vector.broadcast %23 : vector<1x1x1x4x1xf32> to vector<1x1x1x4x128xf32>
    %28 = arith.addf %26, %27 : vector<1x1x1x4x128xf32>
    %c0_24 = arith.constant 0 : index
    %c0_25 = arith.constant 0 : index
    %c0_26 = arith.constant 0 : index
    %c0_27 = arith.constant 0 : index
    %c0_28 = arith.constant 0 : index
    %29 = vector.load %arg5[%c0_24, %c0_25, %c0_26, %c0_27, %c0_28] : memref<1x1x1x4x128xf32, #tpu.memory_space<vmem>>, vector<1x1x1x4x128xf32>
    tpu.vector_store %arg5[%c0_24, %c0_25, %c0_26, %c0_27, %c0_28], %28 {strides = array<i32>} : memref<1x1x1x4x128xf32, #tpu.memory_space<vmem>>, vector<1x1x1x4x128xf32>,
    return
  }
  func.func @transform_0(%arg0: i32, %arg1: i32) -> (i32, i32, i32, i32, i32) {
    %c0_i32 = arith.constant 0 : i32
    %c0_i32_0 = arith.constant 0 : i32
    %c0_i32_1 = arith.constant 0 : i32
    %c0_i32_2 = arith.constant 0 : i32
    return %arg1, %c0_i32, %arg0, %c0_i32_0, %c0_i32_1 : i32, i32, i32, i32, i32
  }
  func.func @transform_1(%arg0: i32, %arg1: i32) -> (i32, i32, i32, i32, i32) {
    %c0_i32 = arith.constant 0 : i32
    %c0_i32_0 = arith.constant 0 : i32
    %c0_i32_1 = arith.constant 0 : i32
    %c0_i32_2 = arith.constant 0 : i32
    %c0_i32_3 = arith.constant 0 : i32
    return %arg0, %c0_i32, %c0_i32_0, %c0_i32_1, %c0_i32_2 : i32, i32, i32, i32, i32
  }
  func.func @transform_2(%arg0: i32, %arg1: i32) -> (i32, i32, i32, i32, i32) {
    %c0_i32 = arith.constant 0 : i32
    %c0_i32_0 = arith.constant 0 : i32
    %c0_i32_1 = arith.constant 0 : i32
    %c0_i32_2 = arith.constant 0 : i32
    %c0_i32_3 = arith.constant 0 : i32
    return %arg0, %c0_i32, %c0_i32_0, %c0_i32_1, %c0_i32_2 : i32, i32, i32, i32, i32
  }
  func.func @transform_3(%arg0: i32, %arg1: i32) -> (i32, i32, i32, i32, i32) {
    %c0_i32 = arith.constant 0 : i32
    %c0_i32_0 = arith.constant 0 : i32
    %c0_i32_1 = arith.constant 0 : i32
    %c0_i32_2 = arith.constant 0 : i32
    return %arg1, %c0_i32, %arg0, %c0_i32_0, %c0_i32_1 : i32, i32, i32, i32, i32
  }
}

</mosaic_0001>

<llo_original>
// kernel: tpu_custom_call.1
$region0: #{tpu_custom_call.1}
  #allocation0 [shape = 'u32[]', space=smem, size = 0x4, offset = 0x4, fixed_abs, tag = 'smem constant byte address 0x4 - core index']
  #allocation1 [shape = 'u32[144,128]{1,0:T(1,128)}', space=vmem, size = 0x12000, scoped, tag = 'internal scratch']
  %s0 = inlined_call_operand.vmem [shape: f32[2,1,2,4,128], index: 0, kind: input, shape index: {}]
  %s1 = inlined_call_operand.vmem [shape: f32[2,1,1,4,1], index: 1, kind: input, shape index: {}]
  %s2 = inlined_call_operand.vmem [shape: f32[2,1,1,4,1], index: 2, kind: input, shape index: {}]
  %s3 = inlined_call_operand.hbm [shape: f32[2,1,2,4,128], index: 3, kind: output, shape index: {}]
  %s4 = sld [smem:[#allocation0]]
  $region45: #{tpu_custom_call.1} parent=0
    _
  %s6 = ssub.s32 1, %s4
  %s7 = scalar_select 0, %s6, %s4
  $region1: #{tpu_custom_call.1} parent=0
    #allocation2 [shape = 'u8[4096]{0}', space=vmem, size = 0x1000, scoped, tag = 'output window, operand 0']
    #allocation3 [shape = 's32[2]{0}', space=sflag, size = 0x8, scoped, tag = 'scoped memory for tpu_custom_call.1']
    %8 = vsyncpa [#allocation3], 0
    %s9 = scalar_lea.sflag [#allocation3], 1
    %10 = vsyncpa %s9, 0
    loop: start=0, step=1, limit=6
    $region2: #{tpu_custom_call.1} parent=1 // loop_pre_header
      _
    $region3: #{tpu_custom_call.1} parent=1 // loop_header
      %s12 = sphi 0, %s16
      %p13 = scmp.ge.s32.totalorder %s12, 6
      %s19 = sphi 0, %s31
      %s20 = sphi 0, %s27
      %s21 = sphi 0, %s19
      %s22 = sphi 0, %s20
      %s23 = sphi 0, %s21
      %s24 = sphi 0, %s22
      %s36 = sphi 0, %s38
      %s39 = sphi 0, %s36
      %s40 = sphi 0, %s39
      %s56 = sphi 0, %s40
      %s62 = sphi 0, %s64
      %s65 = sphi 0, %s62
      %s66 = sphi 0, %s65
      %s82 = sphi 0, %s66
      %s88 = sphi 0, %s90
      %s91 = sphi 0, %s88
      %s92 = sphi 0, %s91
      %s108 = sphi 0, %s92
      %s116 = sphi 0, %s118
      %s119 = sphi 0, %s116
      %s120 = sphi 0, %s119
      %s136 = sphi 0, %s120
    $region4: #{tpu_custom_call.1} parent=1 // loop_header_branch
      %15 = sbr.rel (%p13) target = $region8
    $region5: #{tpu_custom_call.1} parent=1 // loop_body
      %s17 = ssub.s32 %s12, 1
      %s18 = ssub.s32 %s12, 2
      %s25 = sadd.s32 1, %s20
      %p26 = scmp.ge.s32.totalorder %s25, 2
      %s27 = scalar_select %p26, 0, %s25
      %s28 = sadd.s32 1, %s19
      %s29 = scalar_select %p26, %s28, %s19
      %p30 = scmp.ge.s32.totalorder %s29, 2
      %s31 = scalar_select %p30, 0, %s29
      %s32 = ssub.s32 %s20, %s27
      %s33 = ssub.s32 %s19, %s31
      %s34 = sor.u32 %s32, %s33
      %p35 = scmp.eq.s32.totalorder %s34, 0
      %s37 = sadd.s32 %s36, 1
      %s38 = scalar_select %p35, %s36, %s37
      %p41 = pneg %p35
      %p42 = scmp.eq.s32.totalorder %s12, 3
      %p43 = por %p41, %p42
      %p44 = scmp.ne.s32.totalorder %s36, %s39
      %p45 = scmp.eq.s32.totalorder %s12, 0
      %p46 = por %p44, %p45
      %p47 = scmp.ne.s32.totalorder %s36, %s39
      %p48 = scmp.eq.s32.totalorder %s17, 3
      %p49 = por %p47, %p48
      %p50 = scmp.ne.s32.totalorder %s39, %s40
      %p51 = scmp.eq.s32.totalorder %s17, 0
      %p52 = por %p50, %p51
      %p53 = scmp.ne.s32.totalorder %s39, %s40
      %p54 = scmp.eq.s32.totalorder %s18, 3
      %p55 = por %p53, %p54
      %p57 = scmp.ne.s32.totalorder %s40, %s56
      %p58 = scmp.eq.s32.totalorder %s18, 0
      %p59 = por %p57, %p58
      %s60 = ssub.s32 %s19, %s31
      %p61 = scmp.eq.s32.totalorder %s60, 0
      %s63 = sadd.s32 %s62, 1
      %s64 = scalar_select %p61, %s62, %s63
      %p67 = pneg %p61
      %p68 = scmp.eq.s32.totalorder %s12, 3
      %p69 = por %p67, %p68
      %p70 = scmp.ne.s32.totalorder %s62, %s65
      %p71 = scmp.eq.s32.totalorder %s12, 0
      %p72 = por %p70, %p71
      %p73 = scmp.ne.s32.totalorder %s62, %s65
      %p74 = scmp.eq.s32.totalorder %s17, 3
      %p75 = por %p73, %p74
      %p76 = scmp.ne.s32.totalorder %s65, %s66
      %p77 = scmp.eq.s32.totalorder %s17, 0
      %p78 = por %p76, %p77
      %p79 = scmp.ne.s32.totalorder %s65, %s66
      %p80 = scmp.eq.s32.totalorder %s18, 3
      %p81 = por %p79, %p80
      %p83 = scmp.ne.s32.totalorder %s66, %s82
      %p84 = scmp.eq.s32.totalorder %s18, 0
      %p85 = por %p83, %p84
      %s86 = ssub.s32 %s19, %s31
      %p87 = scmp.eq.s32.totalorder %s86, 0
      %s89 = sadd.s32 %s88, 1
      %s90 = scalar_select %p87, %s88, %s89
      %p93 = pneg %p87
      %p94 = scmp.eq.s32.totalorder %s12, 3
      %p95 = por %p93, %p94
      %p96 = scmp.ne.s32.totalorder %s88, %s91
      %p97 = scmp.eq.s32.totalorder %s12, 0
      %p98 = por %p96, %p97
      %p99 = scmp.ne.s32.totalorder %s88, %s91
      %p100 = scmp.eq.s32.totalorder %s17, 3
      %p101 = por %p99, %p100
      %p102 = scmp.ne.s32.totalorder %s91, %s92
      %p103 = scmp.eq.s32.totalorder %s17, 0
      %p104 = por %p102, %p103
      %p105 = scmp.ne.s32.totalorder %s91, %s92
      %p106 = scmp.eq.s32.totalorder %s18, 3
      %p107 = por %p105, %p106
      %p109 = scmp.ne.s32.totalorder %s92, %s108
      %p110 = scmp.eq.s32.totalorder %s18, 0
      %p111 = por %p109, %p110
      %s112 = ssub.s32 %s20, %s27
      %s113 = ssub.s32 %s19, %s31
      %s114 = sor.u32 %s112, %s113
      %p115 = scmp.eq.s32.totalorder %s114, 0
      %s117 = sadd.s32 %s116, 1
      %s118 = scalar_select %p115, %s116, %s117
      %p121 = pneg %p115
      %p122 = scmp.eq.s32.totalorder %s12, 3
      %p123 = por %p121, %p122
      %p124 = scmp.ne.s32.totalorder %s116, %s119
      %p125 = scmp.eq.s32.totalorder %s12, 0
      %p126 = por %p124, %p125
      %p127 = scmp.ne.s32.totalorder %s116, %s119
      %p128 = scmp.eq.s32.totalorder %s17, 3
      %p129 = por %p127, %p128
      %p130 = scmp.ne.s32.totalorder %s119, %s120
      %p131 = scmp.eq.s32.totalorder %s17, 0
      %p132 = por %p130, %p131
      %p133 = scmp.ne.s32.totalorder %s119, %s120
      %p134 = scmp.eq.s32.totalorder %s18, 3
      %p135 = por %p133, %p134
      %p137 = scmp.ne.s32.totalorder %s120, %s136
      %p138 = scmp.eq.s32.totalorder %s18, 0
      %p139 = por %p137, %p138
      %p140 = scmp.le.s32.totalorder 1, %s12
      %p141 = scmp.lt.s32.totalorder %s12, 5
      %p142 = pnand %p140, %p141
      %p143 = pneg %p142
      // Predicated region
      $region9: #{tpu_custom_call.1} parent=5 // pred_check
        _
      $region10: #{tpu_custom_call.1} parent=5 // pred_check_branch
        %145 = sbr.rel (%p142) target = $region12
      $region11: #{tpu_custom_call.1} parent=5 // pred_region
        %s146 = ssub.s32 %s12, 1
      $region12: #{tpu_custom_call.1} parent=5 // pred_fallthru
        _
      %p147 = scmp.lt.s32.totalorder %s12, 4
      // Predicated region
      $region13: #{tpu_custom_call.1} parent=5 // pred_check
        %p148 = pneg %p147
      $region14: #{tpu_custom_call.1} parent=5 // pred_check_branch
        %150 = sbr.rel (%p148) target = $region16
      $region15: #{tpu_custom_call.1} parent=5 // pred_region
        // Predicated region
        $region17: #{tpu_custom_call.1} parent=15 // pred_check
          %p151 = pneg %p46
        $region18: #{tpu_custom_call.1} parent=15 // pred_check_branch
          %153 = sbr.rel (%p151) target = $region20
        $region19: #{tpu_custom_call.1} parent=15 // pred_region
          %p154 = scmp.lt.s32.totalorder %s20, 1
          %s155 = scalar_select %p154, %s20, 1
          %p156 = scmp.lt.s32.totalorder %s19, 1
          %s157 = scalar_select %p156, %s19, 1
          %s158 = smul.addr %s155, 2
          %s159 = sadd.s32 %s157, %s158
          %s160 = smul.addr %s159, 4
          %s161 = scalar_lea.vmem %s0, %s160
        $region20: #{tpu_custom_call.1} parent=15 // pred_fallthru
          _
        // Predicated region
        $region21: #{tpu_custom_call.1} parent=15 // pred_check
          %p162 = pneg %p72
        $region22: #{tpu_custom_call.1} parent=15 // pred_check_branch
          %164 = sbr.rel (%p162) target = $region24
        $region23: #{tpu_custom_call.1} parent=15 // pred_region
          %p165 = scmp.lt.s32.totalorder %s19, 1
          %s166 = scalar_select %p165, %s19, 1
          %s167 = smul.addr %s166, 4
          %s168 = scalar_lea.vmem %s1, %s167
        $region24: #{tpu_custom_call.1} parent=15 // pred_fallthru
          _
        // Predicated region
        $region25: #{tpu_custom_call.1} parent=15 // pred_check
          %p169 = pneg %p98
        $region26: #{tpu_custom_call.1} parent=15 // pred_check_branch
          %171 = sbr.rel (%p169) target = $region28
        $region27: #{tpu_custom_call.1} parent=15 // pred_region
          %p172 = scmp.lt.s32.totalorder %s19, 1
          %s173 = scalar_select %p172, %s19, 1
          %s174 = smul.addr %s173, 4
          %s175 = scalar_lea.vmem %s2, %s174
        $region28: #{tpu_custom_call.1} parent=15 // pred_fallthru
          _
      $region16: #{tpu_custom_call.1} parent=5 // pred_fallthru
        _
      %p176 = scmp.le.s32.totalorder 1, %s12
      %p177 = scmp.lt.s32.totalorder %s12, 5
      %p178 = pnand %p176, %p177
      %p179 = pneg %p178
      // Predicated region
      $region29: #{tpu_custom_call.1} parent=5 // pred_check
        _
      $region30: #{tpu_custom_call.1} parent=5 // pred_check_branch
        %181 = sbr.rel (%p178) target = $region32
      $region31: #{tpu_custom_call.1} parent=5 // pred_region
        %s182 = ssub.s32 %s12, 1
        %p183 = scmp.lt.s32.totalorder %s22, 1
        %s184 = scalar_select %p183, %s22, 1
        %p185 = scmp.lt.s32.totalorder %s21, 1
        %s186 = scalar_select %p185, %s21, 1
        %s187 = smul.addr %s184, 2
        %s188 = sadd.s32 %s186, %s187
        %s189 = smul.addr %s188, 4
        %s190 = scalar_lea.vmem %s0, %s189
        %p191 = pneg %p52
        %p192 = pneg %p49
        %p193 = scmp.lt.s32.totalorder %s21, 1
        %s194 = scalar_select %p193, %s21, 1
        %s195 = smul.addr %s194, 4
        %s196 = scalar_lea.vmem %s1, %s195
        %p197 = pneg %p78
        %p198 = pneg %p75
        %p199 = scmp.lt.s32.totalorder %s21, 1
        %s200 = scalar_select %p199, %s21, 1
        %s201 = smul.addr %s200, 4
        %s202 = scalar_lea.vmem %s2, %s201
        %p203 = pneg %p104
        %p204 = pneg %p101
        %p205 = pneg %p132
        %p206 = pneg %p129
        %s207 = sand.u32 %s119, 1
        %s208 = scalar_lea.sflag [#allocation3], %s207
        %s209 = sand.u32 %s119, 1
        %s210 = smul.addr %s209, 4
        %s211 = scalar_lea.vmem [#allocation2], %s210
        %p212 = scmp.lt.s32.totalorder %s22, 1
        %s213 = scalar_select %p212, %s22, 1
        %p214 = scmp.lt.s32.totalorder %s21, 1
        %s215 = scalar_select %p214, %s21, 1
        %s216 = smul.addr %s213, 2
        %s217 = sadd.s32 %s215, %s216
        %s218 = smul.addr %s217, 4
        %s219 = scalar_lea.vmem %s0, %s218
        %p220 = scmp.lt.s32.totalorder %s21, 1
        %s221 = scalar_select %p220, %s21, 1
        %s222 = smul.addr %s221, 4
        %s223 = scalar_lea.vmem %s1, %s222
        %p224 = scmp.lt.s32.totalorder %s21, 1
        %s225 = scalar_select %p224, %s21, 1
        %s226 = smul.addr %s225, 4
        %s227 = scalar_lea.vmem %s2, %s226
        %v228 = vld [vmem:[%s219] sm:$0xf]
        %vm229 = vcmask 1043456
        %v230 = vsel %vm229, %v228, 0.0
        %231 = vadd.xlane.f32.xlu0 %v230
        %v232 = vpop.xlane.xlu0 %231
        %v233 = vrot.slane %v232, 4
        %v234 = vadd.f32 %v232, %v233
        %v235 = vrot.slane %v234, 2
        %v236 = vadd.f32 %v234, %v235
        %v237 = vrot.slane %v236, 1
        %v238 = vadd.f32 %v236, %v237
        %s239 = vtos %v238
        %v240 = vmul.f32 %v228, %v228
        %v241 = vsel %vm229, %v240, 0.0
        %242 = vadd.xlane.f32.xlu0 %v241
        %v243 = vpop.xlane.xlu0 %242
        %v244 = vrot.slane %v243, 4
        %v245 = vadd.f32 %v243, %v244
        %v246 = vrot.slane %v245, 2
        %v247 = vadd.f32 %v245, %v246
        %v248 = vrot.slane %v247, 1
        %v249 = vadd.f32 %v247, %v248
        %s250 = vtos %v249
        %s251 = smul.f32 %s239, 0.001953125
        %s252 = smul.f32 %s250, 0.001953125
        %s253 = smul.f32 %s251, %s251
        %s254 = ssub.f32 %s252, %s253
        %s255 = smax.f32 %s254, 0.0
        %s256 = sadd.f32 %s255, 1e-05
        %v257 = vstv %s256
        %v258 = vrsqrt.pop %v257
        %s259 = vtos %v258
        %v260 = vld [vmem:[%s223] sm:$0xf]
        %v261 = vstv %s259
        %v262 = vmul.f32 %v260, %v261
        %v263 = vld [vmem:[%s227] sm:$0xf]
        %v264 = vstv %s251
        %v265 = vmul.f32 %v264, %v262
        %v266 = vsub.f32 %v263, %v265
        %268 = vset.pattern.permute.xlu0 0
        %269 = vperm.xlu0 %268, %v262
        %v270 = vpop.permute.xlu0 %269
        %v272 = vmul.f32 %v228, %v270
        %274 = vset.pattern.permute.xlu0 0
        %275 = vperm.xlu0 %274, %v266
        %v276 = vpop.permute.xlu0 %275
        %v278 = vadd.f32 %v272, %v276
        %279 = vst [vmem:[%s211] sm:$0xf] %v278
        %s280 = sand.u32 %s119, 1
        %s281 = scalar_lea.sflag [#allocation3], %s280
        %s282 = sand.u32 %s119, 1
        %s283 = smul.addr %s282, 4
        %s284 = scalar_lea.vmem [#allocation2], %s283
        // Predicated region
        $region33: #{tpu_custom_call.1} parent=31 // pred_check
          %p285 = pneg %p129
        $region34: #{tpu_custom_call.1} parent=31 // pred_check_branch
          %287 = sbr.rel (%p285) target = $region36
        $region35: #{tpu_custom_call.1} parent=31 // pred_region
          %s289 = ssub.s32 64, 64
          %290 = vsyncadd %s281, %s289
          %s291 = smul.addr %s22, 2
          %s292 = sadd.s32 %s21, %s291
          %s293 = smul.addr %s292, 64
          %s294 = scalar_lea.hbm %s3, %s293
          %s296 = sshll.u32 %s284, 4
          %s297 = int_to_ptr.vmem [resolvable:$true] %s296
          %299 = dma.vmem_to_hbm [thread:$0]  %s297, 64, %s294, %s281
        $region36: #{tpu_custom_call.1} parent=31 // pred_fallthru
          _
      $region32: #{tpu_custom_call.1} parent=5 // pred_fallthru
        _
      %p300 = scmp.le.s32.totalorder 2, %s12
      // Predicated region
      $region37: #{tpu_custom_call.1} parent=5 // pred_check
        %p301 = pneg %p300
      $region38: #{tpu_custom_call.1} parent=5 // pred_check_branch
        %303 = sbr.rel (%p301) target = $region40
      $region39: #{tpu_custom_call.1} parent=5 // pred_region
        %s304 = ssub.s32 %s12, 2
        // Predicated region
        $region41: #{tpu_custom_call.1} parent=39 // pred_check
          %p305 = pneg %p135
        $region42: #{tpu_custom_call.1} parent=39 // pred_check_branch
          %307 = sbr.rel (%p305) target = $region44
        $region43: #{tpu_custom_call.1} parent=39 // pred_region
          %s308 = sand.u32 %s120, 1
          %s309 = scalar_lea.sflag [#allocation3], %s308
          %s310 = sand.u32 %s120, 1
          %s311 = smul.addr %s310, 4
          %s312 = scalar_lea.vmem [#allocation2], %s311
          %313 = dma.done %s309, 64
        $region44: #{tpu_custom_call.1} parent=39 // pred_fallthru
          _
      $region40: #{tpu_custom_call.1} parent=5 // pred_fallthru
        _
    $region6: #{tpu_custom_call.1} parent=1 // loop_footer
      %s16 = sadd.s32 1, %s12
    $region7: #{tpu_custom_call.1} parent=1 // loop_footer_branch
      %11 = sbr.rel target = $region3
    $region8: #{tpu_custom_call.1} parent=1 // loop_exit
      _
    %314 = vsyncpa [#allocation3], 1
    %s315 = scalar_lea.sflag [#allocation3], 1
    %316 = vsyncpa %s315, 1

</llo_original>
